<compile_context>
chip_gen: v7x
topology: tpu7x:2x2x1
jax: 0.10.0
libtpu: 0.0.40
codegen_flags: <defaults>
</compile_context>

<pallas_src>
import jax
import jax.numpy as jnp
from jax import lax
from jax.experimental import pallas as pl
from jax.experimental.pallas import tpu as pltpu


def _multitask_partials_kernel(logits_ref,   # VMEM (C, 8, T8)  logits, pixels dense in (sublane, lane)
                               tgt_ref,      # VMEM (1, 8, T8)  int32 semantic target (255 == ignore)
                               ip_ref,       # VMEM (2, 8, T8)  instance pred
                               it_ref,       # VMEM (2, 8, T8)  instance target
                               im_ref,       # VMEM (1, 8, T8)  instance mask (broadcast over channels)
                               dp_ref,       # VMEM (1, 8, T8)  depth pred (channel already squeezed)
                               dt_ref,       # VMEM (1, 8, T8)  depth target
                               dm_ref,       # VMEM (1, 8, T8)  depth mask
                               acc_ref):     # VMEM (6, 8, T8)  resident per-batch partial-sum block:
                                             #   [ce_sum, ce_cnt, inst_l1, inst_nnz, depth_l1, depth_nnz]
    j = pl.program_id(1)

    @pl.when(j == 0)
    def _init():
        acc_ref[...] = jnp.zeros_like(acc_ref)

    # ---------------- semantic cross entropy partials (ignore_index=255) ----------------
    logits = logits_ref[...].astype(jnp.float32)                     # (C, 8, T8)
    tgt = tgt_ref[...]                                               # (1, 8, T8) int32
    num_classes = logits.shape[0]
    classes = lax.broadcasted_iota(jnp.int32, (num_classes, 1, 1), 0)
    valid = tgt != 255                                               # (1, 8, T8)

    m = jnp.max(logits, axis=0, keepdims=True)                       # elementwise max over C planes
    z = logits - m
    lse = jnp.log(jnp.sum(jnp.exp(z), axis=0, keepdims=True))        # (1, 8, T8)
    picked = jnp.sum(jnp.where(classes == tgt, z, 0.0),
                     axis=0, keepdims=True)                          # no float one-hot materialized
    ce = jnp.where(valid, lse - picked, 0.0)                         # per-pixel CE, 0 on ignored px

    acc_ref[0] += ce[0]
    acc_ref[1] += valid[0].astype(jnp.float32)

    # ---------------- instance masked-L1 partials (mask read once, broadcast in-kernel) ----------------
    im = im_ref[...].astype(jnp.float32)                             # (1, 8, T8)
    ip = ip_ref[...].astype(jnp.float32)                             # (2, 8, T8)
    it = it_ref[...].astype(jnp.float32)
    acc_ref[2] += jnp.sum(jnp.abs(im * (ip - it)), axis=0)           # elementwise add of 2 planes
    acc_ref[3] += jnp.sum(((it * im) != 0.0).astype(jnp.float32), axis=0)

    # ---------------- depth masked-L1 partials ----------------
    dm = dm_ref[0].astype(jnp.float32)                               # (8, T8)
    dp = dp_ref[0].astype(jnp.float32)
    dt = dt_ref[0].astype(jnp.float32)
    acc_ref[4] += jnp.abs(dm * (dp - dt))
    acc_ref[5] += ((dt * dm) != 0.0).astype(jnp.float32)


def _pick_tile_lanes(hw8, cap_lanes=4096):
    """Largest divisor of hw8 (= H*W/8) that is a multiple of 128 lanes and <= cap_lanes.

    cap_lanes=4096 == 32768 pixels per step (safe for v5e's 16 MiB scoped VMEM default
    while large enough to approach HBM roofline on v6e/v7x).
    Falls back to the full extent when hw8 is small or has no lane-aligned divisor.
    """
    if hw8 <= cap_lanes:
        return hw8
    best = None
    t = 128
    while t <= cap_lanes:
        if hw8 % t == 0:
            best = t
        t += 128
    if best is None:
        # TODO(synk): pad-and-mask instead of a full-extent fallback for pathological sizes.
        return hw8
    return best


def _as_float(x):
    # Keep native float dtype on the wire (bf16 stays bf16); upcast happens in-kernel.
    return x if jnp.issubdtype(x.dtype, jnp.floating) else x.astype(jnp.float32)


class MultiTaskLossPallas:
    """'fixed' mode MultiTaskLoss (three tasks)."""

    def __init__(self, loss_uncertainties=(1.0, 1.0, 1.0), enabled_tasks=(True, True, True)):
        assert len(loss_uncertainties) == 3 and len(enabled_tasks) == 3
        self.loss_uncertainties = tuple(float(u) for u in loss_uncertainties)
        self.enabled_tasks = tuple(bool(e) for e in enabled_tasks)

    def __call__(self, predicted, sem_seg_target, instance_target, instance_mask,
                 depth_target, depth_mask):
        sem_seg_pred, instance_pred, depth_pred = predicted
        N, C, H, W = sem_seg_pred.shape
        HW = H * W
        assert HW % 8 == 0, "H*W must be a multiple of 8"  # TODO(synk): pad/mask ragged spatial sizes
        HW8 = HW // 8
        T8 = _pick_tile_lanes(HW8)
        nt = HW8 // T8

        # Free row-major reshapes only: pixels fill (8 sublanes x T8 lanes); channels are the
        # leading (non-vreg) dim.  No transpose, no mask broadcast materialization, no dtype
        # conversion pass for float inputs.
        logits = _as_float(sem_seg_pred).reshape(N, C, 8, HW8)
        tgt = sem_seg_target.astype(jnp.int32).reshape(N, 1, 8, HW8)
        ip = _as_float(instance_pred).reshape(N, 2, 8, HW8)
        it = _as_float(instance_target).reshape(N, 2, 8, HW8)
        im = _as_float(instance_mask).reshape(N, 1, 8, HW8)
        dp = _as_float(depth_pred).reshape(N, 1, 8, HW8)
        dt = _as_float(depth_target).reshape(N, 1, 8, HW8)
        dm = _as_float(depth_mask).reshape(N, 1, 8, HW8)

        imap = lambda i, j: (i, 0, 0, j)

        def spec(rows):
            # Leading (batch) dim squeezed out; (rows, 8, T8) block per step.
            return pl.BlockSpec((None, rows, 8, T8), imap)

        # Per-batch vector partial sums; the output block is the accumulator (resident across
        # the pixel axis), so the batch axis is race-free and can be "parallel" (v7x dual-TC).
        partials = pl.pallas_call(
            _multitask_partials_kernel,
            grid=(N, nt),
            in_specs=[spec(C), spec(1), spec(2), spec(2), spec(1),
                      spec(1), spec(1), spec(1)],
            out_specs=pl.BlockSpec((None, 6, 8, T8), lambda i, j: (i, 0, 0, 0)),
            out_shape=jax.ShapeDtypeStruct((N, 6, 8, T8), jnp.float32),
            compiler_params=pltpu.CompilerParams(
                dimension_semantics=("parallel", "arbitrary"),
                vmem_limit_bytes=48 * 1024 * 1024),
        )(logits, tgt, ip, it, im, dp, dt, dm)

        # Trivial finalize in plain JAX (tree reduce over the tiny partials tensor).
        sums = jnp.sum(partials, axis=(0, 2, 3))                     # (6,)
        ce_sum, ce_cnt = sums[0], sums[1]
        i_l1, i_nnz = sums[2], sums[3]
        d_l1, d_nnz = sums[4], sums[5]

        sem_loss = ce_sum / ce_cnt   # NaN when every pixel is ignored, matching torch CrossEntropyLoss
        inst_loss = jnp.where(i_nnz > 0.0, i_l1 / i_nnz, jnp.float32(0.0))
        depth_loss = jnp.where(d_nnz > 0.0, d_l1 / d_nnz, jnp.float32(0.0))

        w_sem, w_inst, w_depth = self.loss_uncertainties
        sem_e, inst_e, depth_e = self.enabled_tasks
        total = jnp.float32(0.0)
        if sem_e:
            total = total + w_sem * sem_loss
        if inst_e:
            total = total + w_inst * inst_loss
        if depth_e:
            total = total + w_depth * depth_loss

        sem_item = sem_loss if sem_e else jnp.float32(0.0)
        inst_item = inst_loss if inst_e else jnp.float32(0.0)
        depth_item = depth_loss if depth_e else jnp.float32(0.0)
        return total, (sem_item, inst_item, depth_item)


def _reference(weights, predicted, sem_t, inst_t, inst_m, depth_t, depth_m):
    """Pure-JAX reference mirroring the PyTorch module."""
    sem_p, inst_p, depth_p = predicted
    logits = jnp.transpose(sem_p, (0, 2, 3, 1)).reshape(-1, sem_p.shape[1])
    tgt = sem_t.reshape(-1)
    logp = jax.nn.log_softmax(logits, axis=-1)
    valid = (tgt != 255)
    picked = jnp.take_along_axis(logp, jnp.where(valid, tgt, 0)[:, None], axis=1)[:, 0]
    sem_loss = jnp.sum(jnp.where(valid, -picked, 0.0)) / jnp.sum(valid.astype(jnp.float32))

    def masked_l1(pred, target, mask):
        t = target * mask
        p = pred * mask
        s = jnp.sum(jnp.abs(p - t))
        nnz = jnp.sum((t != 0.0).astype(jnp.float32))
        return jnp.where(nnz > 0, s / nnz, 0.0)

    inst_loss = masked_l1(inst_p, inst_t, jnp.broadcast_to(inst_m, inst_t.shape))
    depth_loss = masked_l1(jnp.squeeze(depth_p, 1), depth_t, depth_m)
    total = weights[0] * sem_loss + weights[1] * inst_loss + weights[2] * depth_loss
    return total, (sem_loss, inst_loss, depth_loss)


if __name__ == "__main__":
    key = jax.random.PRNGKey(0)
    N, C, H, W = 2, 8, 16, 16
    ks = jax.random.split(key, 8)

    sem_seg_pred = jax.random.normal(ks[0], (N, C, H, W), dtype=jnp.float32)
    sem_seg_target = jax.random.randint(ks[1], (N, H, W), 0, C).astype(jnp.int32)
    ignore = jax.random.uniform(ks[2], (N, H, W)) < 0.1
    sem_seg_target = jnp.where(ignore, 255, sem_seg_target)

    instance_pred = jax.random.normal(ks[3], (N, 2, H, W), dtype=jnp.float32)
    instance_target = jax.random.normal(ks[4], (N, 2, H, W), dtype=jnp.float32)
    instance_mask = (jax.random.uniform(ks[5], (N, 1, H, W)) > 0.3).astype(jnp.float32)

    depth_pred = jax.random.normal(ks[6], (N, 1, H, W), dtype=jnp.float32)
    depth_target = jax.random.normal(ks[7], (N, H, W), dtype=jnp.float32)
    depth_mask = (jax.random.uniform(ks[2], (N, H, W)) > 0.2).astype(jnp.float32)

    loss_uncertainties = (1.0, 1.0, 10.0)  # fixed-mode weights
    module = MultiTaskLossPallas(loss_uncertainties)

    total, (sem_i, inst_i, depth_i) = module(
        (sem_seg_pred, instance_pred, depth_pred),
        sem_seg_target, instance_target, instance_mask, depth_target, depth_mask)
    jax.block_until_ready(total)

    ref_total, (r_sem, r_inst, r_depth) = _reference(
        jnp.array(loss_uncertainties, jnp.float32),
        (sem_seg_pred, instance_pred, depth_pred),
        sem_seg_target, instance_target, instance_mask, depth_target, depth_mask)
    assert jnp.allclose(total, ref_total, rtol=1e-4, atol=1e-5), (total, ref_total)
    assert jnp.allclose(sem_i, r_sem, rtol=1e-4, atol=1e-5)
    assert jnp.allclose(inst_i, r_inst, rtol=1e-4, atol=1e-5)
    assert jnp.allclose(depth_i, r_depth, rtol=1e-4, atol=1e-5)

    print("KERNEL_OK")
</pallas_src>

<mosaic_0001>
module attributes {stable_mosaic.version = 11 : i64} {
  func.func @_multitask_partials_kernel(%arg0: i32, %arg1: i32, %arg2: memref<1x8x8x32xf32, #tpu.memory_space<vmem>>, %arg3: memref<1x1x8x32xi32, #tpu.memory_space<vmem>>, %arg4: memref<1x2x8x32xf32, #tpu.memory_space<vmem>>, %arg5: memref<1x2x8x32xf32, #tpu.memory_space<vmem>>, %arg6: memref<1x1x8x32xf32, #tpu.memory_space<vmem>>, %arg7: memref<1x1x8x32xf32, #tpu.memory_space<vmem>>, %arg8: memref<1x1x8x32xf32, #tpu.memory_space<vmem>>, %arg9: memref<1x1x8x32xf32, #tpu.memory_space<vmem>>, %arg10: memref<1x6x8x32xf32, #tpu.memory_space<vmem>>) attributes {dimension_semantics = [#tpu.dimension_semantics<parallel>, #tpu.dimension_semantics<arbitrary>], iteration_bounds = array<i64: 2, 1>, scalar_prefetch = 0 : i64, scratch_operands = 0 : i64, tpu.core_type = #tpu.core_type<tc>, window_params = [{transform_indices = @transform_0, window_bounds = array<i64: 1, 8, 8, 32>}, {transform_indices = @transform_1, window_bounds = array<i64: 1, 1, 8, 32>}, {transform_indices = @transform_2, window_bounds = array<i64: 1, 2, 8, 32>}, {transform_indices = @transform_3, window_bounds = array<i64: 1, 2, 8, 32>}, {transform_indices = @transform_4, window_bounds = array<i64: 1, 1, 8, 32>}, {transform_indices = @transform_5, window_bounds = array<i64: 1, 1, 8, 32>}, {transform_indices = @transform_6, window_bounds = array<i64: 1, 1, 8, 32>}, {transform_indices = @transform_7, window_bounds = array<i64: 1, 1, 8, 32>}, {transform_indices = @transform_8, window_bounds = array<i64: 1, 6, 8, 32>}]} {
    %c0_i32 = arith.constant 0 : i32
    %0 = arith.cmpi eq, %arg1, %c0_i32 : i32
    %1 = arith.extui %0 : i1 to i32
    %c0_i32_0 = arith.constant 0 : i32
    %2 = arith.cmpi ne, %1, %c0_i32_0 : i32
    scf.if %2 {
      %cst_83 = arith.constant 0.000000e+00 : f32
      %100 = vector.broadcast %cst_83 : f32 to vector<6x8x32xf32>
      %c0_84 = arith.constant 0 : index
      %c0_85 = arith.constant 0 : index
      %c0_86 = arith.constant 0 : index
      %c0_87 = arith.constant 0 : index
      %101 = vector.load %arg10[%c0_84, %c0_85, %c0_86, %c0_87] : memref<1x6x8x32xf32, #tpu.memory_space<vmem>>, vector<1x6x8x32xf32>
      %102 = vector.shape_cast %101 : vector<1x6x8x32xf32> to vector<6x8x32xf32>
      %103 = vector.shape_cast %100 : vector<6x8x32xf32> to vector<1x6x8x32xf32>
      tpu.vector_store %arg10[%c0_84, %c0_85, %c0_86, %c0_87], %103 {strides = array<i32>} : memref<1x6x8x32xf32, #tpu.memory_space<vmem>>, vector<1x6x8x32xf32>,
    } else {
    }
    %c0 = arith.constant 0 : index
    %c0_1 = arith.constant 0 : index
    %c0_2 = arith.constant 0 : index
    %c0_3 = arith.constant 0 : index
    %3 = vector.load %arg2[%c0, %c0_1, %c0_2, %c0_3] : memref<1x8x8x32xf32, #tpu.memory_space<vmem>>, vector<1x8x8x32xf32>
    %4 = vector.shape_cast %3 : vector<1x8x8x32xf32> to vector<8x8x32xf32>
    %c0_4 = arith.constant 0 : index
    %c0_5 = arith.constant 0 : index
    %c0_6 = arith.constant 0 : index
    %c0_7 = arith.constant 0 : index
    %5 = vector.load %arg3[%c0_4, %c0_5, %c0_6, %c0_7] : memref<1x1x8x32xi32, #tpu.memory_space<vmem>>, vector<1x1x8x32xi32>
    %6 = vector.shape_cast %5 : vector<1x1x8x32xi32> to vector<1x8x32xi32>
    %7 = tpu.iota {dimensions = array<i32: 0>} : vector<8x1x1xi32>
    %c255_i32 = arith.constant 255 : i32
    %8 = vector.broadcast %c255_i32 : i32 to vector<1x8x32xi32>
    %9 = arith.cmpi ne, %6, %8 : vector<1x8x32xi32>
    %cst = arith.constant dense<0xFF800000> : vector<8x32xf32>
    %10 = vector.multi_reduction <maximumf>, %4, %cst [0] : vector<8x8x32xf32> to vector<8x32xf32>
    %11 = vector.shape_cast %10 : vector<8x32xf32> to vector<1x8x32xf32>
    %12 = vector.broadcast %11 : vector<1x8x32xf32> to vector<8x8x32xf32>
    %13 = arith.subf %4, %12 : vector<8x8x32xf32>
    %14 = math.exp %13 : vector<8x8x32xf32>
    %cst_8 = arith.constant dense<0.000000e+00> : vector<8x32xf32>
    %15 = vector.multi_reduction <add>, %14, %cst_8 [0] : vector<8x8x32xf32> to vector<8x32xf32>
    %16 = vector.shape_cast %15 : vector<8x32xf32> to vector<1x8x32xf32>
    %17 = math.log %16 : vector<1x8x32xf32>
    %18 = vector.broadcast %7 : vector<8x1x1xi32> to vector<8x8x32xi32>
    %19 = vector.broadcast %6 : vector<1x8x32xi32> to vector<8x8x32xi32>
    %20 = arith.cmpi eq, %18, %19 : vector<8x8x32xi32>
    %cst_9 = arith.constant 0.000000e+00 : f32
    %21 = vector.broadcast %cst_9 : f32 to vector<8x8x32xf32>
    %22 = arith.select %20, %13, %21 : vector<8x8x32xi1>, vector<8x8x32xf32>
    %cst_10 = arith.constant dense<0.000000e+00> : vector<8x32xf32>
    %23 = vector.multi_reduction <add>, %22, %cst_10 [0] : vector<8x8x32xf32> to vector<8x32xf32>
    %24 = vector.shape_cast %23 : vector<8x32xf32> to vector<1x8x32xf32>
    %25 = arith.subf %17, %24 : vector<1x8x32xf32>
    %cst_11 = arith.constant 0.000000e+00 : f32
    %26 = vector.broadcast %cst_11 : f32 to vector<1x8x32xf32>
    %27 = arith.select %9, %25, %26 : vector<1x8x32xi1>, vector<1x8x32xf32>
    %c0_12 = arith.constant 0 : index
    %c0_13 = arith.constant 0 : index
    %c0_14 = arith.constant 0 : index
    %c0_15 = arith.constant 0 : index
    %28 = vector.load %arg10[%c0_12, %c0_13, %c0_14, %c0_15] : memref<1x6x8x32xf32, #tpu.memory_space<vmem>>, vector<1x1x8x32xf32>
    %29 = vector.shape_cast %28 : vector<1x1x8x32xf32> to vector<8x32xf32>
    %30 = vector.shape_cast %27 : vector<1x8x32xf32> to vector<8x32xf32>
    %31 = arith.addf %29, %30 : vector<8x32xf32>
    %c0_16 = arith.constant 0 : index
    %c0_17 = arith.constant 0 : index
    %c0_18 = arith.constant 0 : index
    %c0_19 = arith.constant 0 : index
    %32 = vector.load %arg10[%c0_16, %c0_17, %c0_18, %c0_19] : memref<1x6x8x32xf32, #tpu.memory_space<vmem>>, vector<1x1x8x32xf32>
    %33 = vector.shape_cast %32 : vector<1x1x8x32xf32> to vector<8x32xf32>
    %34 = vector.shape_cast %31 : vector<8x32xf32> to vector<1x1x8x32xf32>
    tpu.vector_store %arg10[%c0_16, %c0_17, %c0_18, %c0_19], %34 {strides = array<i32>} : memref<1x6x8x32xf32, #tpu.memory_space<vmem>>, vector<1x1x8x32xf32>,
    %c0_20 = arith.constant 0 : index
    %c1 = arith.constant 1 : index
    %c0_21 = arith.constant 0 : index
    %c0_22 = arith.constant 0 : index
    %35 = vector.load %arg10[%c0_20, %c1, %c0_21, %c0_22] : memref<1x6x8x32xf32, #tpu.memory_space<vmem>>, vector<1x1x8x32xf32>
    %36 = vector.shape_cast %35 : vector<1x1x8x32xf32> to vector<8x32xf32>
    %37 = vector.shape_cast %9 : vector<1x8x32xi1> to vector<8x32xi1>
    %38 = arith.extui %37 : vector<8x32xi1> to vector<8x32xi32>
    %39 = arith.sitofp %38 : vector<8x32xi32> to vector<8x32xf32>
    %40 = arith.addf %36, %39 : vector<8x32xf32>
    %c0_23 = arith.constant 0 : index
    %c1_24 = arith.constant 1 : index
    %c0_25 = arith.constant 0 : index
    %c0_26 = arith.constant 0 : index
    %41 = vector.load %arg10[%c0_23, %c1_24, %c0_25, %c0_26] : memref<1x6x8x32xf32, #tpu.memory_space<vmem>>, vector<1x1x8x32xf32>
    %42 = vector.shape_cast %41 : vector<1x1x8x32xf32> to vector<8x32xf32>
    %43 = vector.shape_cast %40 : vector<8x32xf32> to vector<1x1x8x32xf32>
    tpu.vector_store %arg10[%c0_23, %c1_24, %c0_25, %c0_26], %43 {strides = array<i32>} : memref<1x6x8x32xf32, #tpu.memory_space<vmem>>, vector<1x1x8x32xf32>,
    %c0_27 = arith.constant 0 : index
    %c0_28 = arith.constant 0 : index
    %c0_29 = arith.constant 0 : index
    %c0_30 = arith.constant 0 : index
    %44 = vector.load %arg6[%c0_27, %c0_28, %c0_29, %c0_30] : memref<1x1x8x32xf32, #tpu.memory_space<vmem>>, vector<1x1x8x32xf32>
    %45 = vector.shape_cast %44 : vector<1x1x8x32xf32> to vector<1x8x32xf32>
    %c0_31 = arith.constant 0 : index
    %c0_32 = arith.constant 0 : index
    %c0_33 = arith.constant 0 : index
    %c0_34 = arith.constant 0 : index
    %46 = vector.load %arg4[%c0_31, %c0_32, %c0_33, %c0_34] : memref<1x2x8x32xf32, #tpu.memory_space<vmem>>, vector<1x2x8x32xf32>
    %47 = vector.shape_cast %46 : vector<1x2x8x32xf32> to vector<2x8x32xf32>
    %c0_35 = arith.constant 0 : index
    %c0_36 = arith.constant 0 : index
    %c0_37 = arith.constant 0 : index
    %c0_38 = arith.constant 0 : index
    %48 = vector.load %arg5[%c0_35, %c0_36, %c0_37, %c0_38] : memref<1x2x8x32xf32, #tpu.memory_space<vmem>>, vector<1x2x8x32xf32>
    %49 = vector.shape_cast %48 : vector<1x2x8x32xf32> to vector<2x8x32xf32>
    %c0_39 = arith.constant 0 : index
    %c2 = arith.constant 2 : index
    %c0_40 = arith.constant 0 : index
    %c0_41 = arith.constant 0 : index
    %50 = vector.load %arg10[%c0_39, %c2, %c0_40, %c0_41] : memref<1x6x8x32xf32, #tpu.memory_space<vmem>>, vector<1x1x8x32xf32>
    %51 = vector.shape_cast %50 : vector<1x1x8x32xf32> to vector<8x32xf32>
    %52 = arith.subf %47, %49 : vector<2x8x32xf32>
    %53 = vector.broadcast %45 : vector<1x8x32xf32> to vector<2x8x32xf32>
    %54 = arith.mulf %53, %52 : vector<2x8x32xf32>
    %55 = math.absf %54 : vector<2x8x32xf32>
    %cst_42 = arith.constant dense<0.000000e+00> : vector<8x32xf32>
    %56 = vector.multi_reduction <add>, %55, %cst_42 [0] : vector<2x8x32xf32> to vector<8x32xf32>
    %57 = arith.addf %51, %56 : vector<8x32xf32>
    %c0_43 = arith.constant 0 : index
    %c2_44 = arith.constant 2 : index
    %c0_45 = arith.constant 0 : index
    %c0_46 = arith.constant 0 : index
    %58 = vector.load %arg10[%c0_43, %c2_44, %c0_45, %c0_46] : memref<1x6x8x32xf32, #tpu.memory_space<vmem>>, vector<1x1x8x32xf32>
    %59 = vector.shape_cast %58 : vector<1x1x8x32xf32> to vector<8x32xf32>
    %60 = vector.shape_cast %57 : vector<8x32xf32> to vector<1x1x8x32xf32>
    tpu.vector_store %arg10[%c0_43, %c2_44, %c0_45, %c0_46], %60 {strides = array<i32>} : memref<1x6x8x32xf32, #tpu.memory_space<vmem>>, vector<1x1x8x32xf32>,
    %c0_47 = arith.constant 0 : index
    %c3 = arith.constant 3 : index
    %c0_48 = arith.constant 0 : index
    %c0_49 = arith.constant 0 : index
    %61 = vector.load %arg10[%c0_47, %c3, %c0_48, %c0_49] : memref<1x6x8x32xf32, #tpu.memory_space<vmem>>, vector<1x1x8x32xf32>
    %62 = vector.shape_cast %61 : vector<1x1x8x32xf32> to vector<8x32xf32>
    %63 = vector.broadcast %45 : vector<1x8x32xf32> to vector<2x8x32xf32>
    %64 = arith.mulf %49, %63 : vector<2x8x32xf32>
    %cst_50 = arith.constant 0.000000e+00 : f32
    %65 = vector.broadcast %cst_50 : f32 to vector<2x8x32xf32>
    %66 = arith.cmpf one, %64, %65 : vector<2x8x32xf32>
    %67 = arith.extui %66 : vector<2x8x32xi1> to vector<2x8x32xi32>
    %68 = arith.sitofp %67 : vector<2x8x32xi32> to vector<2x8x32xf32>
    %cst_51 = arith.constant dense<0.000000e+00> : vector<8x32xf32>
    %69 = vector.multi_reduction <add>, %68, %cst_51 [0] : vector<2x8x32xf32> to vector<8x32xf32>
    %70 = arith.addf %62, %69 : vector<8x32xf32>
    %c0_52 = arith.constant 0 : index
    %c3_53 = arith.constant 3 : index
    %c0_54 = arith.constant 0 : index
    %c0_55 = arith.constant 0 : index
    %71 = vector.load %arg10[%c0_52, %c3_53, %c0_54, %c0_55] : memref<1x6x8x32xf32, #tpu.memory_space<vmem>>, vector<1x1x8x32xf32>
    %72 = vector.shape_cast %71 : vector<1x1x8x32xf32> to vector<8x32xf32>
    %73 = vector.shape_cast %70 : vector<8x32xf32> to vector<1x1x8x32xf32>
    tpu.vector_store %arg10[%c0_52, %c3_53, %c0_54, %c0_55], %73 {strides = array<i32>} : memref<1x6x8x32xf32, #tpu.memory_space<vmem>>, vector<1x1x8x32xf32>,
    %c0_56 = arith.constant 0 : index
    %c0_57 = arith.constant 0 : index
    %c0_58 = arith.constant 0 : index
    %c0_59 = arith.constant 0 : index
    %74 = vector.load %arg9[%c0_56, %c0_57, %c0_58, %c0_59] : memref<1x1x8x32xf32, #tpu.memory_space<vmem>>, vector<1x1x8x32xf32>
    %75 = vector.shape_cast %74 : vector<1x1x8x32xf32> to vector<8x32xf32>
    %c0_60 = arith.constant 0 : index
    %c0_61 = arith.constant 0 : index
    %c0_62 = arith.constant 0 : index
    %c0_63 = arith.constant 0 : index
    %76 = vector.load %arg7[%c0_60, %c0_61, %c0_62, %c0_63] : memref<1x1x8x32xf32, #tpu.memory_space<vmem>>, vector<1x1x8x32xf32>
    %77 = vector.shape_cast %76 : vector<1x1x8x32xf32> to vector<8x32xf32>
    %c0_64 = arith.constant 0 : index
    %c0_65 = arith.constant 0 : index
    %c0_66 = arith.constant 0 : index
    %c0_67 = arith.constant 0 : index
    %78 = vector.load %arg8[%c0_64, %c0_65, %c0_66, %c0_67] : memref<1x1x8x32xf32, #tpu.memory_space<vmem>>, vector<1x1x8x32xf32>
    %79 = vector.shape_cast %78 : vector<1x1x8x32xf32> to vector<8x32xf32>
    %c0_68 = arith.constant 0 : index
    %c4 = arith.constant 4 : index
    %c0_69 = arith.constant 0 : index
    %c0_70 = arith.constant 0 : index
    %80 = vector.load %arg10[%c0_68, %c4, %c0_69, %c0_70] : memref<1x6x8x32xf32, #tpu.memory_space<vmem>>, vector<1x1x8x32xf32>
    %81 = vector.shape_cast %80 : vector<1x1x8x32xf32> to vector<8x32xf32>
    %82 = arith.subf %77, %79 : vector<8x32xf32>
    %83 = arith.mulf %75, %82 : vector<8x32xf32>
    %84 = math.absf %83 : vector<8x32xf32>
    %85 = arith.addf %81, %84 : vector<8x32xf32>
    %c0_71 = arith.constant 0 : index
    %c4_72 = arith.constant 4 : index
    %c0_73 = arith.constant 0 : index
    %c0_74 = arith.constant 0 : index
    %86 = vector.load %arg10[%c0_71, %c4_72, %c0_73, %c0_74] : memref<1x6x8x32xf32, #tpu.memory_space<vmem>>, vector<1x1x8x32xf32>
    %87 = vector.shape_cast %86 : vector<1x1x8x32xf32> to vector<8x32xf32>
    %88 = vector.shape_cast %85 : vector<8x32xf32> to vector<1x1x8x32xf32>
    tpu.vector_store %arg10[%c0_71, %c4_72, %c0_73, %c0_74], %88 {strides = array<i32>} : memref<1x6x8x32xf32, #tpu.memory_space<vmem>>, vector<1x1x8x32xf32>,
    %c0_75 = arith.constant 0 : index
    %c5 = arith.constant 5 : index
    %c0_76 = arith.constant 0 : index
    %c0_77 = arith.constant 0 : index
    %89 = vector.load %arg10[%c0_75, %c5, %c0_76, %c0_77] : memref<1x6x8x32xf32, #tpu.memory_space<vmem>>, vector<1x1x8x32xf32>
    %90 = vector.shape_cast %89 : vector<1x1x8x32xf32> to vector<8x32xf32>
    %91 = arith.mulf %79, %75 : vector<8x32xf32>
    %cst_78 = arith.constant 0.000000e+00 : f32
    %92 = vector.broadcast %cst_78 : f32 to vector<8x32xf32>
    %93 = arith.cmpf one, %91, %92 : vector<8x32xf32>
    %94 = arith.extui %93 : vector<8x32xi1> to vector<8x32xi32>
    %95 = arith.sitofp %94 : vector<8x32xi32> to vector<8x32xf32>
    %96 = arith.addf %90, %95 : vector<8x32xf32>
    %c0_79 = arith.constant 0 : index
    %c5_80 = arith.constant 5 : index
    %c0_81 = arith.constant 0 : index
    %c0_82 = arith.constant 0 : index
    %97 = vector.load %arg10[%c0_79, %c5_80, %c0_81, %c0_82] : memref<1x6x8x32xf32, #tpu.memory_space<vmem>>, vector<1x1x8x32xf32>
    %98 = vector.shape_cast %97 : vector<1x1x8x32xf32> to vector<8x32xf32>
    %99 = vector.shape_cast %96 : vector<8x32xf32> to vector<1x1x8x32xf32>
    tpu.vector_store %arg10[%c0_79, %c5_80, %c0_81, %c0_82], %99 {strides = array<i32>} : memref<1x6x8x32xf32, #tpu.memory_space<vmem>>, vector<1x1x8x32xf32>,
    return
  }
  func.func @transform_0(%arg0: i32, %arg1: i32) -> (i32, i32, i32, i32) {
    %c0_i32 = arith.constant 0 : i32
    %c0_i32_0 = arith.constant 0 : i32
    %c0_i32_1 = arith.constant 0 : i32
    return %arg0, %c0_i32, %c0_i32_0, %arg1 : i32, i32, i32, i32
  }
  func.func @transform_1(%arg0: i32, %arg1: i32) -> (i32, i32, i32, i32) {
    %c0_i32 = arith.constant 0 : i32
    %c0_i32_0 = arith.constant 0 : i32
    %c0_i32_1 = arith.constant 0 : i32
    return %arg0, %c0_i32, %c0_i32_0, %arg1 : i32, i32, i32, i32
  }
  func.func @transform_2(%arg0: i32, %arg1: i32) -> (i32, i32, i32, i32) {
    %c0_i32 = arith.constant 0 : i32
    %c0_i32_0 = arith.constant 0 : i32
    %c0_i32_1 = arith.constant 0 : i32
    return %arg0, %c0_i32, %c0_i32_0, %arg1 : i32, i32, i32, i32
  }
  func.func @transform_3(%arg0: i32, %arg1: i32) -> (i32, i32, i32, i32) {
    %c0_i32 = arith.constant 0 : i32
    %c0_i32_0 = arith.constant 0 : i32
    %c0_i32_1 = arith.constant 0 : i32
    return %arg0, %c0_i32, %c0_i32_0, %arg1 : i32, i32, i32, i32
  }
  func.func @transform_4(%arg0: i32, %arg1: i32) -> (i32, i32, i32, i32) {
    %c0_i32 = arith.constant 0 : i32
    %c0_i32_0 = arith.constant 0 : i32
    %c0_i32_1 = arith.constant 0 : i32
    return %arg0, %c0_i32, %c0_i32_0, %arg1 : i32, i32, i32, i32
  }
  func.func @transform_5(%arg0: i32, %arg1: i32) -> (i32, i32, i32, i32) {
    %c0_i32 = arith.constant 0 : i32
    %c0_i32_0 = arith.constant 0 : i32
    %c0_i32_1 = arith.constant 0 : i32
    return %arg0, %c0_i32, %c0_i32_0, %arg1 : i32, i32, i32, i32
  }
  func.func @transform_6(%arg0: i32, %arg1: i32) -> (i32, i32, i32, i32) {
    %c0_i32 = arith.constant 0 : i32
    %c0_i32_0 = arith.constant 0 : i32
    %c0_i32_1 = arith.constant 0 : i32
    return %arg0, %c0_i32, %c0_i32_0, %arg1 : i32, i32, i32, i32
  }
  func.func @transform_7(%arg0: i32, %arg1: i32) -> (i32, i32, i32, i32) {
    %c0_i32 = arith.constant 0 : i32
    %c0_i32_0 = arith.constant 0 : i32
    %c0_i32_1 = arith.constant 0 : i32
    return %arg0, %c0_i32, %c0_i32_0, %arg1 : i32, i32, i32, i32
  }
  func.func @transform_8(%arg0: i32, %arg1: i32) -> (i32, i32, i32, i32) {
    %c0_i32 = arith.constant 0 : i32
    %c0_i32_0 = arith.constant 0 : i32
    %c0_i32_1 = arith.constant 0 : i32
    %c0_i32_2 = arith.constant 0 : i32
    return %arg0, %c0_i32, %c0_i32_0, %c0_i32_1 : i32, i32, i32, i32
  }
}

</mosaic_0001>

<llo_original>
// kernel: tpu_custom_call.1
$region0: #{tpu_custom_call.1}
  #allocation0 [shape = 'u32[]', space=smem, size = 0x4, offset = 0x4, fixed_abs, tag = 'smem constant byte address 0x4 - core index']
  #allocation1 [shape = 'u32[144,128]{1,0:T(1,128)}', space=vmem, size = 0x12000, scoped, tag = 'internal scratch']
  %s0 = inlined_call_operand.hbm [shape: f32[2,8,8,32], index: 0, kind: input, shape index: {}]
  %s1 = inlined_call_operand.hbm [shape: s32[2,1,8,32], index: 1, kind: input, shape index: {}]
  %s2 = inlined_call_operand.hbm [shape: f32[2,2,8,32], index: 2, kind: input, shape index: {}]
  %s3 = inlined_call_operand.hbm [shape: f32[2,2,8,32], index: 3, kind: input, shape index: {}]
  %s4 = inlined_call_operand.hbm [shape: f32[2,1,8,32], index: 4, kind: input, shape index: {}]
  %s5 = inlined_call_operand.vmem [shape: f32[2,1,8,32], index: 5, kind: input, shape index: {}]
  %s6 = inlined_call_operand.hbm [shape: f32[2,1,8,32], index: 6, kind: input, shape index: {}]
  %s7 = inlined_call_operand.hbm [shape: f32[2,1,8,32], index: 7, kind: input, shape index: {}]
  %s8 = inlined_call_operand.hbm [shape: f32[2,6,8,32], index: 8, kind: output, shape index: {}]
  %s9 = sld [smem:[#allocation0]]
  $region97: #{tpu_custom_call.1} parent=0
    _
  %s11 = ssub.s32 1, %s9
  %s12 = scalar_select 0, %s11, %s9
  $region1: #{tpu_custom_call.1} parent=0
    #allocation2 [shape = 'u8[65536]{0}', space=vmem, size = 0x10000, scoped, tag = 'input window, operand 0']
    #allocation3 [shape = 's32[2]{0}', space=sflag, size = 0x8, scoped, tag = 'scoped memory for tpu_custom_call.1']
    #allocation4 [shape = 's32[2]{0}', space=sflag, size = 0x8, scoped, tag = 'scoped memory for tpu_custom_call.1']
    #allocation5 [shape = 'u8[8192]{0}', space=vmem, size = 0x2000, scoped, tag = 'input window, operand 1']
    #allocation6 [shape = 's32[2]{0}', space=sflag, size = 0x8, scoped, tag = 'scoped memory for tpu_custom_call.1']
    #allocation7 [shape = 'u8[16384]{0}', space=vmem, size = 0x4000, scoped, tag = 'input window, operand 2']
    #allocation8 [shape = 'u8[16384]{0}', space=vmem, size = 0x4000, scoped, tag = 'input window, operand 3']
    #allocation9 [shape = 's32[2]{0}', space=sflag, size = 0x8, scoped, tag = 'scoped memory for tpu_custom_call.1']
    #allocation10 [shape = 'u8[8192]{0}', space=vmem, size = 0x2000, scoped, tag = 'input window, operand 4']
    #allocation11 [shape = 'u8[8192]{0}', space=vmem, size = 0x2000, scoped, tag = 'input window, operand 6']
    #allocation12 [shape = 's32[2]{0}', space=sflag, size = 0x8, scoped, tag = 'scoped memory for tpu_custom_call.1']
    #allocation13 [shape = 'u8[8192]{0}', space=vmem, size = 0x2000, scoped, tag = 'input window, operand 7']
    #allocation14 [shape = 'u8[49152]{0}', space=vmem, size = 0xc000, scoped, tag = 'output window, operand 0']
    %13 = vsyncpa [#allocation3], 0
    %s14 = scalar_lea.sflag [#allocation3], 1
    %15 = vsyncpa %s14, 0
    %16 = vsyncpa [#allocation6], 0
    %s17 = scalar_lea.sflag [#allocation6], 1
    %18 = vsyncpa %s17, 0
    %19 = vsyncpa [#allocation9], 0
    %s20 = scalar_lea.sflag [#allocation9], 1
    %21 = vsyncpa %s20, 0
    %22 = vsyncpa [#allocation12], 0
    %s23 = scalar_lea.sflag [#allocation12], 1
    %24 = vsyncpa %s23, 0
    %25 = vsyncpa [#allocation4], 0
    %s26 = scalar_lea.sflag [#allocation4], 1
    %27 = vsyncpa %s26, 0
    loop: start=0, step=1, limit=4
    $region2: #{tpu_custom_call.1} parent=1 // loop_pre_header
      _
    $region3: #{tpu_custom_call.1} parent=1 // loop_header
      %s29 = sphi 0, %s33
      %p30 = scmp.ge.s32.totalorder %s29, 4
      %s36 = sphi 0, %s48
      %s37 = sphi 0, %s44
      %s38 = sphi 0, %s36
      %s39 = sphi 0, %s37
      %s40 = sphi 0, %s38
      %s41 = sphi 0, %s39
      %s53 = sphi 0, %s55
      %s56 = sphi 0, %s53
      %s57 = sphi 0, %s56
      %s73 = sphi 0, %s57
      %s81 = sphi 0, %s83
      %s84 = sphi 0, %s81
      %s85 = sphi 0, %s84
      %s101 = sphi 0, %s85
      %s109 = sphi 0, %s111
      %s112 = sphi 0, %s109
      %s113 = sphi 0, %s112
      %s129 = sphi 0, %s113
      %s137 = sphi 0, %s139
      %s140 = sphi 0, %s137
      %s141 = sphi 0, %s140
      %s157 = sphi 0, %s141
      %s165 = sphi 0, %s167
      %s168 = sphi 0, %s165
      %s169 = sphi 0, %s168
      %s185 = sphi 0, %s169
      %s193 = sphi 0, %s195
      %s196 = sphi 0, %s193
      %s197 = sphi 0, %s196
      %s213 = sphi 0, %s197
      %s221 = sphi 0, %s223
      %s224 = sphi 0, %s221
      %s225 = sphi 0, %s224
      %s241 = sphi 0, %s225
      %s249 = sphi 0, %s251
      %s252 = sphi 0, %s249
      %s253 = sphi 0, %s252
      %s269 = sphi 0, %s253
      %s275 = sphi 0, %s277
      %s278 = sphi 0, %s275
      %s279 = sphi 0, %s278
      %s295 = sphi 0, %s279
    $region4: #{tpu_custom_call.1} parent=1 // loop_header_branch
      %32 = sbr.rel (%p30) target = $region8
    $region5: #{tpu_custom_call.1} parent=1 // loop_body
      %s34 = ssub.s32 %s29, 1
      %s35 = ssub.s32 %s29, 2
      %s42 = sadd.s32 1, %s37
      %p43 = scmp.ge.s32.totalorder %s42, 1
      %s44 = scalar_select %p43, 0, %s42
      %s45 = sadd.s32 1, %s36
      %s46 = scalar_select %p43, %s45, %s36
      %p47 = scmp.ge.s32.totalorder %s46, 2
      %s48 = scalar_select %p47, 0, %s46
      %s49 = ssub.s32 %s36, %s48
      %s50 = ssub.s32 %s37, %s44
      %s51 = sor.u32 %s49, %s50
      %p52 = scmp.eq.s32.totalorder %s51, 0
      %s54 = sadd.s32 %s53, 1
      %s55 = scalar_select %p52, %s53, %s54
      %p58 = pneg %p52
      %p59 = scmp.eq.s32.totalorder %s29, 1
      %p60 = por %p58, %p59
      %p61 = scmp.ne.s32.totalorder %s53, %s56
      %p62 = scmp.eq.s32.totalorder %s29, 0
      %p63 = por %p61, %p62
      %p64 = scmp.ne.s32.totalorder %s53, %s56
      %p65 = scmp.eq.s32.totalorder %s34, 1
      %p66 = por %p64, %p65
      %p67 = scmp.ne.s32.totalorder %s56, %s57
      %p68 = scmp.eq.s32.totalorder %s34, 0
      %p69 = por %p67, %p68
      %p70 = scmp.ne.s32.totalorder %s56, %s57
      %p71 = scmp.eq.s32.totalorder %s35, 1
      %p72 = por %p70, %p71
      %p74 = scmp.ne.s32.totalorder %s57, %s73
      %p75 = scmp.eq.s32.totalorder %s35, 0
      %p76 = por %p74, %p75
      %s77 = ssub.s32 %s36, %s48
      %s78 = ssub.s32 %s37, %s44
      %s79 = sor.u32 %s77, %s78
      %p80 = scmp.eq.s32.totalorder %s79, 0
      %s82 = sadd.s32 %s81, 1
      %s83 = scalar_select %p80, %s81, %s82
      %p86 = pneg %p80
      %p87 = scmp.eq.s32.totalorder %s29, 1
      %p88 = por %p86, %p87
      %p89 = scmp.ne.s32.totalorder %s81, %s84
      %p90 = scmp.eq.s32.totalorder %s29, 0
      %p91 = por %p89, %p90
      %p92 = scmp.ne.s32.totalorder %s81, %s84
      %p93 = scmp.eq.s32.totalorder %s34, 1
      %p94 = por %p92, %p93
      %p95 = scmp.ne.s32.totalorder %s84, %s85
      %p96 = scmp.eq.s32.totalorder %s34, 0
      %p97 = por %p95, %p96
      %p98 = scmp.ne.s32.totalorder %s84, %s85
      %p99 = scmp.eq.s32.totalorder %s35, 1
      %p100 = por %p98, %p99
      %p102 = scmp.ne.s32.totalorder %s85, %s101
      %p103 = scmp.eq.s32.totalorder %s35, 0
      %p104 = por %p102, %p103
      %s105 = ssub.s32 %s36, %s48
      %s106 = ssub.s32 %s37, %s44
      %s107 = sor.u32 %s105, %s106
      %p108 = scmp.eq.s32.totalorder %s107, 0
      %s110 = sadd.s32 %s109, 1
      %s111 = scalar_select %p108, %s109, %s110
      %p114 = pneg %p108
      %p115 = scmp.eq.s32.totalorder %s29, 1
      %p116 = por %p114, %p115
      %p117 = scmp.ne.s32.totalorder %s109, %s112
      %p118 = scmp.eq.s32.totalorder %s29, 0
      %p119 = por %p117, %p118
      %p120 = scmp.ne.s32.totalorder %s109, %s112
      %p121 = scmp.eq.s32.totalorder %s34, 1
      %p122 = por %p120, %p121
      %p123 = scmp.ne.s32.totalorder %s112, %s113
      %p124 = scmp.eq.s32.totalorder %s34, 0
      %p125 = por %p123, %p124
      %p126 = scmp.ne.s32.totalorder %s112, %s113
      %p127 = scmp.eq.s32.totalorder %s35, 1
      %p128 = por %p126, %p127
      %p130 = scmp.ne.s32.totalorder %s113, %s129
      %p131 = scmp.eq.s32.totalorder %s35, 0
      %p132 = por %p130, %p131
      %s133 = ssub.s32 %s36, %s48
      %s134 = ssub.s32 %s37, %s44
      %s135 = sor.u32 %s133, %s134
      %p136 = scmp.eq.s32.totalorder %s135, 0
      %s138 = sadd.s32 %s137, 1
      %s139 = scalar_select %p136, %s137, %s138
      %p142 = pneg %p136
      %p143 = scmp.eq.s32.totalorder %s29, 1
      %p144 = por %p142, %p143
      %p145 = scmp.ne.s32.totalorder %s137, %s140
      %p146 = scmp.eq.s32.totalorder %s29, 0
      %p147 = por %p145, %p146
      %p148 = scmp.ne.s32.totalorder %s137, %s140
      %p149 = scmp.eq.s32.totalorder %s34, 1
      %p150 = por %p148, %p149
      %p151 = scmp.ne.s32.totalorder %s140, %s141
      %p152 = scmp.eq.s32.totalorder %s34, 0
      %p153 = por %p151, %p152
      %p154 = scmp.ne.s32.totalorder %s140, %s141
      %p155 = scmp.eq.s32.totalorder %s35, 1
      %p156 = por %p154, %p155
      %p158 = scmp.ne.s32.totalorder %s141, %s157
      %p159 = scmp.eq.s32.totalorder %s35, 0
      %p160 = por %p158, %p159
      %s161 = ssub.s32 %s36, %s48
      %s162 = ssub.s32 %s37, %s44
      %s163 = sor.u32 %s161, %s162
      %p164 = scmp.eq.s32.totalorder %s163, 0
      %s166 = sadd.s32 %s165, 1
      %s167 = scalar_select %p164, %s165, %s166
      %p170 = pneg %p164
      %p171 = scmp.eq.s32.totalorder %s29, 1
      %p172 = por %p170, %p171
      %p173 = scmp.ne.s32.totalorder %s165, %s168
      %p174 = scmp.eq.s32.totalorder %s29, 0
      %p175 = por %p173, %p174
      %p176 = scmp.ne.s32.totalorder %s165, %s168
      %p177 = scmp.eq.s32.totalorder %s34, 1
      %p178 = por %p176, %p177
      %p179 = scmp.ne.s32.totalorder %s168, %s169
      %p180 = scmp.eq.s32.totalorder %s34, 0
      %p181 = por %p179, %p180
      %p182 = scmp.ne.s32.totalorder %s168, %s169
      %p183 = scmp.eq.s32.totalorder %s35, 1
      %p184 = por %p182, %p183
      %p186 = scmp.ne.s32.totalorder %s169, %s185
      %p187 = scmp.eq.s32.totalorder %s35, 0
      %p188 = por %p186, %p187
      %s189 = ssub.s32 %s36, %s48
      %s190 = ssub.s32 %s37, %s44
      %s191 = sor.u32 %s189, %s190
      %p192 = scmp.eq.s32.totalorder %s191, 0
      %s194 = sadd.s32 %s193, 1
      %s195 = scalar_select %p192, %s193, %s194
      %p198 = pneg %p192
      %p199 = scmp.eq.s32.totalorder %s29, 1
      %p200 = por %p198, %p199
      %p201 = scmp.ne.s32.totalorder %s193, %s196
      %p202 = scmp.eq.s32.totalorder %s29, 0
      %p203 = por %p201, %p202
      %p204 = scmp.ne.s32.totalorder %s193, %s196
      %p205 = scmp.eq.s32.totalorder %s34, 1
      %p206 = por %p204, %p205
      %p207 = scmp.ne.s32.totalorder %s196, %s197
      %p208 = scmp.eq.s32.totalorder %s34, 0
      %p209 = por %p207, %p208
      %p210 = scmp.ne.s32.totalorder %s196, %s197
      %p211 = scmp.eq.s32.totalorder %s35, 1
      %p212 = por %p210, %p211
      %p214 = scmp.ne.s32.totalorder %s197, %s213
      %p215 = scmp.eq.s32.totalorder %s35, 0
      %p216 = por %p214, %p215
      %s217 = ssub.s32 %s36, %s48
      %s218 = ssub.s32 %s37, %s44
      %s219 = sor.u32 %s217, %s218
      %p220 = scmp.eq.s32.totalorder %s219, 0
      %s222 = sadd.s32 %s221, 1
      %s223 = scalar_select %p220, %s221, %s222
      %p226 = pneg %p220
      %p227 = scmp.eq.s32.totalorder %s29, 1
      %p228 = por %p226, %p227
      %p229 = scmp.ne.s32.totalorder %s221, %s224
      %p230 = scmp.eq.s32.totalorder %s29, 0
      %p231 = por %p229, %p230
      %p232 = scmp.ne.s32.totalorder %s221, %s224
      %p233 = scmp.eq.s32.totalorder %s34, 1
      %p234 = por %p232, %p233
      %p235 = scmp.ne.s32.totalorder %s224, %s225
      %p236 = scmp.eq.s32.totalorder %s34, 0
      %p237 = por %p235, %p236
      %p238 = scmp.ne.s32.totalorder %s224, %s225
      %p239 = scmp.eq.s32.totalorder %s35, 1
      %p240 = por %p238, %p239
      %p242 = scmp.ne.s32.totalorder %s225, %s241
      %p243 = scmp.eq.s32.totalorder %s35, 0
      %p244 = por %p242, %p243
      %s245 = ssub.s32 %s36, %s48
      %s246 = ssub.s32 %s37, %s44
      %s247 = sor.u32 %s245, %s246
      %p248 = scmp.eq.s32.totalorder %s247, 0
      %s250 = sadd.s32 %s249, 1
      %s251 = scalar_select %p248, %s249, %s250
      %p254 = pneg %p248
      %p255 = scmp.eq.s32.totalorder %s29, 1
      %p256 = por %p254, %p255
      %p257 = scmp.ne.s32.totalorder %s249, %s252
      %p258 = scmp.eq.s32.totalorder %s29, 0
      %p259 = por %p257, %p258
      %p260 = scmp.ne.s32.totalorder %s249, %s252
      %p261 = scmp.eq.s32.totalorder %s34, 1
      %p262 = por %p260, %p261
      %p263 = scmp.ne.s32.totalorder %s252, %s253
      %p264 = scmp.eq.s32.totalorder %s34, 0
      %p265 = por %p263, %p264
      %p266 = scmp.ne.s32.totalorder %s252, %s253
      %p267 = scmp.eq.s32.totalorder %s35, 1
      %p268 = por %p266, %p267
      %p270 = scmp.ne.s32.totalorder %s253, %s269
      %p271 = scmp.eq.s32.totalorder %s35, 0
      %p272 = por %p270, %p271
      %s273 = ssub.s32 %s36, %s48
      %p274 = scmp.eq.s32.totalorder %s273, 0
      %s276 = sadd.s32 %s275, 1
      %s277 = scalar_select %p274, %s275, %s276
      %p280 = pneg %p274
      %p281 = scmp.eq.s32.totalorder %s29, 1
      %p282 = por %p280, %p281
      %p283 = scmp.ne.s32.totalorder %s275, %s278
      %p284 = scmp.eq.s32.totalorder %s29, 0
      %p285 = por %p283, %p284
      %p286 = scmp.ne.s32.totalorder %s275, %s278
      %p287 = scmp.eq.s32.totalorder %s34, 1
      %p288 = por %p286, %p287
      %p289 = scmp.ne.s32.totalorder %s278, %s279
      %p290 = scmp.eq.s32.totalorder %s34, 0
      %p291 = por %p289, %p290
      %p292 = scmp.ne.s32.totalorder %s278, %s279
      %p293 = scmp.eq.s32.totalorder %s35, 1
      %p294 = por %p292, %p293
      %p296 = scmp.ne.s32.totalorder %s279, %s295
      %p297 = scmp.eq.s32.totalorder %s35, 0
      %p298 = por %p296, %p297
      %p299 = scmp.le.s32.totalorder 1, %s29
      %p300 = scmp.lt.s32.totalorder %s29, 3
      %p301 = pnand %p299, %p300
      %p302 = pneg %p301
      // Predicated region
      $region9: #{tpu_custom_call.1} parent=5 // pred_check
        _
      $region10: #{tpu_custom_call.1} parent=5 // pred_check_branch
        %304 = sbr.rel (%p301) target = $region12
      $region11: #{tpu_custom_call.1} parent=5 // pred_region
        %s305 = ssub.s32 %s29, 1
      $region12: #{tpu_custom_call.1} parent=5 // pred_fallthru
        _
      %p306 = scmp.lt.s32.totalorder %s29, 2
      // Predicated region
      $region13: #{tpu_custom_call.1} parent=5 // pred_check
        %p307 = pneg %p306
      $region14: #{tpu_custom_call.1} parent=5 // pred_check_branch
        %309 = sbr.rel (%p307) target = $region16
      $region15: #{tpu_custom_call.1} parent=5 // pred_region
        // Predicated region
        $region17: #{tpu_custom_call.1} parent=15 // pred_check
          %p310 = pneg %p63
        $region18: #{tpu_custom_call.1} parent=15 // pred_check_branch
          %312 = sbr.rel (%p310) target = $region20
        $region19: #{tpu_custom_call.1} parent=15 // pred_region
          %s313 = sand.u32 %s53, 1
          %s314 = scalar_lea.sflag [#allocation3], %s313
          %s315 = sand.u32 %s53, 1
          %s316 = smul.addr %s315, 64
          %s317 = scalar_lea.vmem [#allocation2], %s316
          %s319 = ssub.s32 1024, 1024
          %320 = vsyncadd %s314, %s319
          %s321 = smul.addr %s36, 8
          %s322 = sadd.s32 %s37, %s321
          %s323 = smul.addr %s322, 128
          %s324 = scalar_lea.hbm %s0, %s323
          %s325 = sshll.u32 %s317, 4
          %s326 = int_to_ptr.vmem [resolvable:$true] %s325
          %331 = dma.hbm_to_vmem [thread:$0]  %s324, 1024, %s326, %s314, 128, 128, 8
        $region20: #{tpu_custom_call.1} parent=15 // pred_fallthru
          _
        // Predicated region
        $region21: #{tpu_custom_call.1} parent=15 // pred_check
          %p332 = pneg %p91
        $region22: #{tpu_custom_call.1} parent=15 // pred_check_branch
          %334 = sbr.rel (%p332) target = $region24
        $region23: #{tpu_custom_call.1} parent=15 // pred_region
          %s335 = sand.u32 %s29, 1
          %s336 = scalar_lea.sflag [#allocation6], %s335
          %s337 = sand.u32 %s81, 1
          %s338 = smul.addr %s337, 8
          %s339 = scalar_lea.vmem [#allocation5], %s338
          %s341 = ssub.s32 128, 128
          %342 = vsyncadd %s336, %s341
          %s343 = sadd.s32 %s37, %s36
          %s344 = smul.addr %s343, 128
          %s345 = scalar_lea.hbm %s1, %s344
          %s347 = sshll.u32 %s339, 4
          %s348 = int_to_ptr.vmem [resolvable:$true] %s347
          %350 = dma.hbm_to_vmem [thread:$0]  %s345, 128, %s348, %s336
        $region24: #{tpu_custom_call.1} parent=15 // pred_fallthru
          _
        // Predicated region
        $region25: #{tpu_custom_call.1} parent=15 // pred_check
          %p351 = pneg %p119
        $region26: #{tpu_custom_call.1} parent=15 // pred_check_branch
          %353 = sbr.rel (%p351) target = $region28
        $region27: #{tpu_custom_call.1} parent=15 // pred_region
          %s354 = sand.u32 %s29, 1
          %s355 = scalar_lea.sflag [#allocation6], %s354
          %s356 = sand.u32 %s109, 1
          %s357 = smul.addr %s356, 16
          %s358 = scalar_lea.vmem [#allocation7], %s357
          %s360 = ssub.s32 256, 256
          %361 = vsyncadd %s355, %s360
          %s362 = smul.addr %s36, 2
          %s363 = sadd.s32 %s37, %s362
          %s364 = smul.addr %s363, 128
          %s365 = scalar_lea.hbm %s2, %s364
          %s366 = sshll.u32 %s358, 4
          %s367 = int_to_ptr.vmem [resolvable:$true] %s366
          %372 = dma.hbm_to_vmem [thread:$0]  %s365, 256, %s367, %s355, 128, 128, 8
        $region28: #{tpu_custom_call.1} parent=15 // pred_fallthru
          _
        // Predicated region
        $region29: #{tpu_custom_call.1} parent=15 // pred_check
          %p373 = pneg %p147
        $region30: #{tpu_custom_call.1} parent=15 // pred_check_branch
          %375 = sbr.rel (%p373) target = $region32
        $region31: #{tpu_custom_call.1} parent=15 // pred_region
          %s376 = sand.u32 %s29, 1
          %s377 = scalar_lea.sflag [#allocation9], %s376
          %s378 = sand.u32 %s137, 1
          %s379 = smul.addr %s378, 16
          %s380 = scalar_lea.vmem [#allocation8], %s379
          %s382 = ssub.s32 256, 256
          %383 = vsyncadd %s377, %s382
          %s384 = smul.addr %s36, 2
          %s385 = sadd.s32 %s37, %s384
          %s386 = smul.addr %s385, 128
          %s387 = scalar_lea.hbm %s3, %s386
          %s388 = sshll.u32 %s380, 4
          %s389 = int_to_ptr.vmem [resolvable:$true] %s388
          %394 = dma.hbm_to_vmem [thread:$0]  %s387, 256, %s389, %s377, 128, 128, 8
        $region32: #{tpu_custom_call.1} parent=15 // pred_fallthru
          _
        // Predicated region
        $region33: #{tpu_custom_call.1} parent=15 // pred_check
          %p395 = pneg %p175
        $region34: #{tpu_custom_call.1} parent=15 // pred_check_branch
          %397 = sbr.rel (%p395) target = $region36
        $region35: #{tpu_custom_call.1} parent=15 // pred_region
          %s398 = sand.u32 %s29, 1
          %s399 = scalar_lea.sflag [#allocation9], %s398
          %s400 = sand.u32 %s165, 1
          %s401 = smul.addr %s400, 8
          %s402 = scalar_lea.vmem [#allocation10], %s401
          %s404 = ssub.s32 128, 128
          %405 = vsyncadd %s399, %s404
          %s406 = sadd.s32 %s37, %s36
          %s407 = smul.addr %s406, 128
          %s408 = scalar_lea.hbm %s4, %s407
          %s410 = sshll.u32 %s402, 4
          %s411 = int_to_ptr.vmem [resolvable:$true] %s410
          %413 = dma.hbm_to_vmem [thread:$0]  %s408, 128, %s411, %s399
        $region36: #{tpu_custom_call.1} parent=15 // pred_fallthru
          _
        // Predicated region
        $region37: #{tpu_custom_call.1} parent=15 // pred_check
          %p414 = pneg %p203
        $region38: #{tpu_custom_call.1} parent=15 // pred_check_branch
          %416 = sbr.rel (%p414) target = $region40
        $region39: #{tpu_custom_call.1} parent=15 // pred_region
          %p417 = scmp.lt.s32.totalorder %s36, 1
          %s418 = scalar_select %p417, %s36, 1
          %p419 = scmp.lt.s32.totalorder %s37, 0
          %s420 = scalar_select %p419, %s37, 0
          %s421 = sadd.s32 %s420, %s418
          %s422 = smul.addr %s421, 8
          %s423 = scalar_lea.vmem %s5, %s422
        $region40: #{tpu_custom_call.1} parent=15 // pred_fallthru
          _
        // Predicated region
        $region41: #{tpu_custom_call.1} parent=15 // pred_check
          %p424 = pneg %p231
        $region42: #{tpu_custom_call.1} parent=15 // pred_check_branch
          %426 = sbr.rel (%p424) target = $region44
        $region43: #{tpu_custom_call.1} parent=15 // pred_region
          %s427 = sand.u32 %s29, 1
          %s428 = scalar_lea.sflag [#allocation12], %s427
          %s429 = sand.u32 %s221, 1
          %s430 = smul.addr %s429, 8
          %s431 = scalar_lea.vmem [#allocation11], %s430
          %s433 = ssub.s32 128, 128
          %434 = vsyncadd %s428, %s433
          %s435 = sadd.s32 %s37, %s36
          %s436 = smul.addr %s435, 128
          %s437 = scalar_lea.hbm %s6, %s436
          %s439 = sshll.u32 %s431, 4
          %s440 = int_to_ptr.vmem [resolvable:$true] %s439
          %442 = dma.hbm_to_vmem [thread:$0]  %s437, 128, %s440, %s428
        $region44: #{tpu_custom_call.1} parent=15 // pred_fallthru
          _
        // Predicated region
        $region45: #{tpu_custom_call.1} parent=15 // pred_check
          %p443 = pneg %p259
        $region46: #{tpu_custom_call.1} parent=15 // pred_check_branch
          %445 = sbr.rel (%p443) target = $region48
        $region47: #{tpu_custom_call.1} parent=15 // pred_region
          %s446 = sand.u32 %s29, 1
          %s447 = scalar_lea.sflag [#allocation12], %s446
          %s448 = sand.u32 %s249, 1
          %s449 = smul.addr %s448, 8
          %s450 = scalar_lea.vmem [#allocation13], %s449
          %s452 = ssub.s32 128, 128
          %453 = vsyncadd %s447, %s452
          %s454 = sadd.s32 %s37, %s36
          %s455 = smul.addr %s454, 128
          %s456 = scalar_lea.hbm %s7, %s455
          %s458 = sshll.u32 %s450, 4
          %s459 = int_to_ptr.vmem [resolvable:$true] %s458
          %461 = dma.hbm_to_vmem [thread:$0]  %s456, 128, %s459, %s447
        $region48: #{tpu_custom_call.1} parent=15 // pred_fallthru
          _
      $region16: #{tpu_custom_call.1} parent=5 // pred_fallthru
        _
      %p462 = scmp.le.s32.totalorder 1, %s29
      %p463 = scmp.lt.s32.totalorder %s29, 3
      %p464 = pnand %p462, %p463
      %p465 = pneg %p464
      // Predicated region
      $region49: #{tpu_custom_call.1} parent=5 // pred_check
        _
      $region50: #{tpu_custom_call.1} parent=5 // pred_check_branch
        %467 = sbr.rel (%p464) target = $region52
      $region51: #{tpu_custom_call.1} parent=5 // pred_region
        %s468 = ssub.s32 %s29, 1
        %s469 = sand.u32 %s56, 1
        %s470 = scalar_lea.sflag [#allocation3], %s469
        %s471 = sand.u32 %s56, 1
        %s472 = smul.addr %s471, 64
        %s473 = scalar_lea.vmem [#allocation2], %s472
        // Predicated region
        $region53: #{tpu_custom_call.1} parent=51 // pred_check
          %p474 = pneg %p69
        $region54: #{tpu_custom_call.1} parent=51 // pred_check_branch
          %476 = sbr.rel (%p474) target = $region56
        $region55: #{tpu_custom_call.1} parent=51 // pred_region
          %477 = dma.done %s470, 1024
        $region56: #{tpu_custom_call.1} parent=51 // pred_fallthru
          _
        %s478 = sand.u32 %s34, 1
        %s479 = scalar_lea.sflag [#allocation6], %s478
        %s480 = sand.u32 %s84, 1
        %s481 = smul.addr %s480, 8
        %s482 = scalar_lea.vmem [#allocation5], %s481
        // Predicated region
        $region57: #{tpu_custom_call.1} parent=51 // pred_check
          %p483 = pneg %p97
        $region58: #{tpu_custom_call.1} parent=51 // pred_check_branch
          %485 = sbr.rel (%p483) target = $region60
        $region59: #{tpu_custom_call.1} parent=51 // pred_region
          %486 = dma.done %s479, 128
        $region60: #{tpu_custom_call.1} parent=51 // pred_fallthru
          _
        %s487 = sand.u32 %s34, 1
        %s488 = scalar_lea.sflag [#allocation6], %s487
        %s489 = sand.u32 %s112, 1
        %s490 = smul.addr %s489, 16
        %s491 = scalar_lea.vmem [#allocation7], %s490
        // Predicated region
        $region61: #{tpu_custom_call.1} parent=51 // pred_check
          %p492 = pneg %p125
        $region62: #{tpu_custom_call.1} parent=51 // pred_check_branch
          %494 = sbr.rel (%p492) target = $region64
        $region63: #{tpu_custom_call.1} parent=51 // pred_region
          %495 = dma.done %s488, 256
        $region64: #{tpu_custom_call.1} parent=51 // pred_fallthru
          _
        %s496 = sand.u32 %s34, 1
        %s497 = scalar_lea.sflag [#allocation9], %s496
        %s498 = sand.u32 %s140, 1
        %s499 = smul.addr %s498, 16
        %s500 = scalar_lea.vmem [#allocation8], %s499
        // Predicated region
        $region65: #{tpu_custom_call.1} parent=51 // pred_check
          %p501 = pneg %p153
        $region66: #{tpu_custom_call.1} parent=51 // pred_check_branch
          %503 = sbr.rel (%p501) target = $region68
        $region67: #{tpu_custom_call.1} parent=51 // pred_region
          %504 = dma.done %s497, 256
        $region68: #{tpu_custom_call.1} parent=51 // pred_fallthru
          _
        %s505 = sand.u32 %s34, 1
        %s506 = scalar_lea.sflag [#allocation9], %s505
        %s507 = sand.u32 %s168, 1
        %s508 = smul.addr %s507, 8
        %s509 = scalar_lea.vmem [#allocation10], %s508
        // Predicated region
        $region69: #{tpu_custom_call.1} parent=51 // pred_check
          %p510 = pneg %p181
        $region70: #{tpu_custom_call.1} parent=51 // pred_check_branch
          %512 = sbr.rel (%p510) target = $region72
        $region71: #{tpu_custom_call.1} parent=51 // pred_region
          %513 = dma.done %s506, 128
        $region72: #{tpu_custom_call.1} parent=51 // pred_fallthru
          _
        %s514 = sand.u32 %s34, 1
        %s515 = scalar_lea.sflag [#allocation12], %s514
        %s516 = sand.u32 %s224, 1
        %s517 = smul.addr %s516, 8
        %s518 = scalar_lea.vmem [#allocation11], %s517
        // Predicated region
        $region73: #{tpu_custom_call.1} parent=51 // pred_check
          %p519 = pneg %p237
        $region74: #{tpu_custom_call.1} parent=51 // pred_check_branch
          %521 = sbr.rel (%p519) target = $region76
        $region75: #{tpu_custom_call.1} parent=51 // pred_region
          %522 = dma.done %s515, 128
        $region76: #{tpu_custom_call.1} parent=51 // pred_fallthru
          _
        %s523 = sand.u32 %s34, 1
        %s524 = scalar_lea.sflag [#allocation12], %s523
        %s525 = sand.u32 %s252, 1
        %s526 = smul.addr %s525, 8
        %s527 = scalar_lea.vmem [#allocation13], %s526
        // Predicated region
        $region77: #{tpu_custom_call.1} parent=51 // pred_check
          %p528 = pneg %p265
        $region78: #{tpu_custom_call.1} parent=51 // pred_check_branch
          %530 = sbr.rel (%p528) target = $region80
        $region79: #{tpu_custom_call.1} parent=51 // pred_region
          %531 = dma.done %s524, 128
        $region80: #{tpu_custom_call.1} parent=51 // pred_fallthru
          _
        %s532 = sand.u32 %s56, 1
        %s533 = scalar_lea.sflag [#allocation3], %s532
        %s534 = sand.u32 %s56, 1
        %s535 = smul.addr %s534, 64
        %s536 = scalar_lea.vmem [#allocation2], %s535
        %p537 = pneg %p69
        %p538 = pneg %p66
        %s539 = sand.u32 %s34, 1
        %s540 = scalar_lea.sflag [#allocation6], %s539
        %s541 = sand.u32 %s84, 1
        %s542 = smul.addr %s541, 8
        %s543 = scalar_lea.vmem [#allocation5], %s542
        %p544 = pneg %p97
        %p545 = pneg %p94
        %s546 = sand.u32 %s34, 1
        %s547 = scalar_lea.sflag [#allocation6], %s546
        %s548 = sand.u32 %s112, 1
        %s549 = smul.addr %s548, 16
        %s550 = scalar_lea.vmem [#allocation7], %s549
        %p551 = pneg %p125
        %p552 = pneg %p122
        %s553 = sand.u32 %s34, 1
        %s554 = scalar_lea.sflag [#allocation9], %s553
        %s555 = sand.u32 %s140, 1
        %s556 = smul.addr %s555, 16
        %s557 = scalar_lea.vmem [#allocation8], %s556
        %p558 = pneg %p153
        %p559 = pneg %p150
        %s560 = sand.u32 %s34, 1
        %s561 = scalar_lea.sflag [#allocation9], %s560
        %s562 = sand.u32 %s168, 1
        %s563 = smul.addr %s562, 8
        %s564 = scalar_lea.vmem [#allocation10], %s563
        %p565 = pneg %p181
        %p566 = pneg %p178
        %p567 = scmp.lt.s32.totalorder %s38, 1
        %s568 = scalar_select %p567, %s38, 1
        %p569 = scmp.lt.s32.totalorder %s39, 0
        %s570 = scalar_select %p569, %s39, 0
        %s571 = sadd.s32 %s570, %s568
        %s572 = smul.addr %s571, 8
        %s573 = scalar_lea.vmem %s5, %s572
        %p574 = pneg %p209
        %p575 = pneg %p206
        %s576 = sand.u32 %s34, 1
        %s577 = scalar_lea.sflag [#allocation12], %s576
        %s578 = sand.u32 %s224, 1
        %s579 = smul.addr %s578, 8
        %s580 = scalar_lea.vmem [#allocation11], %s579
        %p581 = pneg %p237
        %p582 = pneg %p234
        %s583 = sand.u32 %s34, 1
        %s584 = scalar_lea.sflag [#allocation12], %s583
        %s585 = sand.u32 %s252, 1
        %s586 = smul.addr %s585, 8
        %s587 = scalar_lea.vmem [#allocation13], %s586
        %p588 = pneg %p265
        %p589 = pneg %p262
        %p590 = pneg %p291
        %p591 = pneg %p288
        %s592 = sand.u32 %s278, 1
        %s593 = scalar_lea.sflag [#allocation4], %s592
        %s594 = sand.u32 %s278, 1
        %s595 = smul.addr %s594, 48
        %s596 = scalar_lea.vmem [#allocation14], %s595
        %p597 = scmp.lt.s32.totalorder %s38, 1
        %s598 = scalar_select %p597, %s38, 1
        %p599 = scmp.lt.s32.totalorder %s39, 0
        %s600 = scalar_select %p599, %s39, 0
        %s601 = sadd.s32 %s600, %s598
        %s602 = smul.addr %s601, 8
        %s603 = scalar_lea.vmem %s5, %s602
        %p604 = scmp.eq.s32.totalorder %s39, 0
        // Predicated region
        $region81: #{tpu_custom_call.1} parent=51 // pred_check
          %p605 = pneg %p604
        $region82: #{tpu_custom_call.1} parent=51 // pred_check_branch
          %607 = sbr.rel (%p605) target = $region84
        $region83: #{tpu_custom_call.1} parent=51 // pred_region
          %vm608 = vcmask 261120
          %609 = vst.msk [vmem:[%s596] sm:$0xff] %vm608, 0.0
          %610 = vst.msk [vmem:[%s596 + $0x8] sm:$0xff] %vm608, 0.0
          %611 = vst.msk [vmem:[%s596 + $0x10] sm:$0xff] %vm608, 0.0
          %612 = vst.msk [vmem:[%s596 + $0x18] sm:$0xff] %vm608, 0.0
          %613 = vst.msk [vmem:[%s596 + $0x20] sm:$0xff] %vm608, 0.0
          %614 = vst.msk [vmem:[%s596 + $0x28] sm:$0xff] %vm608, 0.0
        $region84: #{tpu_custom_call.1} parent=51 // pred_fallthru
          _
        %v615 = vld [vmem:[%s473] sm:$0xff]
        %v616 = vld [vmem:[%s473 + $0x8] sm:$0xff]
        %v617 = vld [vmem:[%s473 + $0x10] sm:$0xff]
        %v618 = vld [vmem:[%s473 + $0x18] sm:$0xff]
        %v619 = vld [vmem:[%s473 + $0x20] sm:$0xff]
        %v620 = vld [vmem:[%s473 + $0x28] sm:$0xff]
        %v621 = vld [vmem:[%s473 + $0x30] sm:$0xff]
        %v622 = vld [vmem:[%s473 + $0x38] sm:$0xff]
        %v623 = vld [vmem:[%s482] sm:$0xff]
        %vm624 = vcmp.ne.s32.totalorder %v623, 255
        %vm625 = vcmask 261120
        %v626 = vsel %vm625, %v615, -inf
        %v627 = vsel %vm625, %v616, -inf
        %v628 = vsel %vm625, %v617, -inf
        %v629 = vsel %vm625, %v618, -inf
        %v630 = vsel %vm625, %v619, -inf
        %v631 = vmax.f32 %v626, %v630
        %v632 = vsel %vm625, %v620, -inf
        %v633 = vmax.f32 %v627, %v632
        %v634 = vsel %vm625, %v621, -inf
        %v635 = vmax.f32 %v628, %v634
        %v636 = vsel %vm625, %v622, -inf
        %v637 = vmax.f32 %v629, %v636
        %v638 = vmax.f32 %v631, %v633
        %v639 = vmax.f32 %v635, %v637
        %v640 = vmax.f32 %v638, %v639
        %v641 = vsub.f32 %v615, %v640
        %v642 = vsub.f32 %v616, %v640
        %v643 = vsub.f32 %v617, %v640
        %v644 = vsub.f32 %v618, %v640
        %v645 = vsub.f32 %v619, %v640
        %v646 = vsub.f32 %v620, %v640
        %v647 = vsub.f32 %v621, %v640
        %v648 = vsub.f32 %v622, %v640
        %v649 = vmul.f32 %v641, 1.442695
        %v650 = vpow.pop %v649
        %v651 = vmul.f32 %v642, 1.442695
        %v652 = vpow.pop %v651
        %v653 = vmul.f32 %v643, 1.442695
        %v654 = vpow.pop %v653
        %v655 = vmul.f32 %v644, 1.442695
        %v656 = vpow.pop %v655
        %v657 = vmul.f32 %v645, 1.442695
        %v658 = vpow.pop %v657
        %v659 = vmul.f32 %v646, 1.442695
        %v660 = vpow.pop %v659
        %v661 = vmul.f32 %v647, 1.442695
        %v662 = vpow.pop %v661
        %v663 = vmul.f32 %v648, 1.442695
        %v664 = vpow.pop %v663
        %v665 = vsel %vm625, %v650, 0.0
        %v666 = vsel %vm625, %v652, 0.0
        %v667 = vadd.f32 %v665, %v666
        %v668 = vsel %vm625, %v654, 0.0
        %v669 = vadd.f32 %v667, %v668
        %v670 = vsel %vm625, %v656, 0.0
        %v671 = vadd.f32 %v669, %v670
        %v672 = vsel %vm625, %v658, 0.0
        %v673 = vadd.f32 %v671, %v672
        %v674 = vsel %vm625, %v660, 0.0
        %v675 = vadd.f32 %v673, %v674
        %v676 = vsel %vm625, %v662, 0.0
        %v677 = vadd.f32 %v675, %v676
        %v678 = vsel %vm625, %v664, 0.0
        %v679 = vadd.f32 %v677, %v678
        %v680 = vlog2.pop %v679
        %v681 = vmul.f32 %v680, 0.6931472
        %vm682 = vcmp.eq.s32.totalorder %v623, 0
        %vm683 = vcmp.eq.s32.totalorder %v623, 1
        %vm684 = vcmp.eq.s32.totalorder %v623, 2
        %vm685 = vcmp.eq.s32.totalorder %v623, 3
        %vm686 = vcmp.eq.s32.totalorder %v623, 4
        %vm687 = vcmp.eq.s32.totalorder %v623, 5
        %vm688 = vcmp.eq.s32.totalorder %v623, 6
        %vm689 = vcmp.eq.s32.totalorder %v623, 7
        %v690 = vsel %vm682, %v641, 0.0
        %v691 = vsel %vm683, %v642, 0.0
        %v692 = vsel %vm684, %v643, 0.0
        %v693 = vsel %vm685, %v644, 0.0
        %v694 = vsel %vm686, %v645, 0.0
        %v695 = vsel %vm687, %v646, 0.0
        %v696 = vsel %vm688, %v647, 0.0
        %v697 = vsel %vm689, %v648, 0.0
        %v698 = vsel %vm625, %v690, 0.0
        %v699 = vsel %vm625, %v691, 0.0
        %v700 = vadd.f32 %v698, %v699
        %v701 = vsel %vm625, %v692, 0.0
        %v702 = vadd.f32 %v700, %v701
        %v703 = vsel %vm625, %v693, 0.0
        %v704 = vadd.f32 %v702, %v703
        %v705 = vsel %vm625, %v694, 0.0
        %v706 = vadd.f32 %v704, %v705
        %v707 = vsel %vm625, %v695, 0.0
        %v708 = vadd.f32 %v706, %v707
        %v709 = vsel %vm625, %v696, 0.0
        %v710 = vadd.f32 %v708, %v709
        %v711 = vsel %vm625, %v697, 0.0
        %v712 = vadd.f32 %v710, %v711
        %v713 = vsub.f32 %v681, %v712
        %v714 = vsel %vm624, %v713, 0.0
        %v715 = vld [vmem:[%s596] sm:$0xff]
        %v716 = vadd.f32 %v715, %v714
        %717 = vst.msk [vmem:[%s596] sm:$0xff] %vm625, %v716
        %s718 = scalar_lea.vmem %s596, 8 [#allocation14]
        %v719 = vld [vmem:[%s718] sm:$0xff]
        %v720 = vsel %vm624, 1, 0
        %v721 = vcvt.s32.f32 %v720
        %v722 = vadd.f32 %v719, %v721
        %723 = vst.msk [vmem:[%s718] sm:$0xff] %vm625, %v722
        %v724 = vld [vmem:[%s509] sm:$0xff]
        %v725 = vld [vmem:[%s491] sm:$0xff]
        %v726 = vld [vmem:[%s491 + $0x8] sm:$0xff]
        %v727 = vld [vmem:[%s500] sm:$0xff]
        %v728 = vld [vmem:[%s500 + $0x8] sm:$0xff]
        %s729 = scalar_lea.vmem %s596, 16 [#allocation14]
        %v730 = vld [vmem:[%s729] sm:$0xff]
        %v731 = vsub.f32 %v725, %v727
        %v732 = vsub.f32 %v726, %v728
        %v733 = vmul.f32 %v724, %v731
        %v734 = vmul.f32 %v724, %v732
        %v735 = vand.u32 2147483647, %v733
        %v736 = vand.u32 2147483647, %v734
        %v737 = vsel %vm625, %v735, 0.0
        %v738 = vsel %vm625, %v736, 0.0
        %v739 = vadd.f32 %v737, %v738
        %v740 = vadd.f32 %v730, %v739
        %741 = vst.msk [vmem:[%s729] sm:$0xff] %vm625, %v740
        %s742 = scalar_lea.vmem %s596, 24 [#allocation14]
        %v743 = vld [vmem:[%s742] sm:$0xff]
        %v744 = vmul.f32 %v727, %v724
        %v745 = vmul.f32 %v728, %v724
        %vm746 = vcmp.ne.f32.partialorder %v744, 0.0
        %vm747 = vcmp.ne.f32.partialorder %v745, 0.0
        %v748 = vsel %vm746, 1, 0
        %v749 = vsel %vm747, 1, 0
        %v750 = vcvt.s32.f32 %v748
        %v751 = vcvt.s32.f32 %v749
        %v752 = vsel %vm625, %v750, 0.0
        %v753 = vsel %vm625, %v751, 0.0
        %v754 = vadd.f32 %v752, %v753
        %v755 = vadd.f32 %v743, %v754
        %756 = vst.msk [vmem:[%s742] sm:$0xff] %vm625, %v755
        %v757 = vld [vmem:[%s527] sm:$0xff]
        %v758 = vld [vmem:[%s603] sm:$0xff]
        %v759 = vld [vmem:[%s518] sm:$0xff]
        %s760 = scalar_lea.vmem %s596, 32 [#allocation14]
        %v761 = vld [vmem:[%s760] sm:$0xff]
        %v762 = vsub.f32 %v758, %v759
        %v763 = vmul.f32 %v757, %v762
        %v764 = vand.u32 2147483647, %v763
        %v765 = vadd.f32 %v761, %v764
        %766 = vst.msk [vmem:[%s760] sm:$0xff] %vm625, %v765
        %s767 = scalar_lea.vmem %s596, 40 [#allocation14]
        %v768 = vld [vmem:[%s767] sm:$0xff]
        %v769 = vmul.f32 %v759, %v757
        %vm770 = vcmp.ne.f32.partialorder %v769, 0.0
        %v771 = vsel %vm770, 1, 0
        %v772 = vcvt.s32.f32 %v771
        %v773 = vadd.f32 %v768, %v772
        %774 = vst.msk [vmem:[%s767] sm:$0xff] %vm625, %v773
        %s775 = sand.u32 %s278, 1
        %s776 = scalar_lea.sflag [#allocation4], %s775
        %s777 = sand.u32 %s278, 1
        %s778 = smul.addr %s777, 48
        %s779 = scalar_lea.vmem [#allocation14], %s778
        // Predicated region
        $region85: #{tpu_custom_call.1} parent=51 // pred_check
          %p780 = pneg %p288
        $region86: #{tpu_custom_call.1} parent=51 // pred_check_branch
          %782 = sbr.rel (%p780) target = $region88
        $region87: #{tpu_custom_call.1} parent=51 // pred_region
          %s784 = ssub.s32 768, 768
          %785 = vsyncadd %s776, %s784
          %s786 = smul.addr %s38, 6
          %s787 = smul.addr %s786, 128
          %s788 = scalar_lea.hbm %s8, %s787
          %s789 = sshll.u32 %s779, 4
          %s790 = int_to_ptr.vmem [resolvable:$true] %s789
          %795 = dma.vmem_to_hbm [thread:$0]  %s790, 768, %s788, %s776, 128, 128, 8
        $region88: #{tpu_custom_call.1} parent=51 // pred_fallthru
          _
      $region52: #{tpu_custom_call.1} parent=5 // pred_fallthru
        _
      %p796 = scmp.le.s32.totalorder 2, %s29
      // Predicated region
      $region89: #{tpu_custom_call.1} parent=5 // pred_check
        %p797 = pneg %p796
      $region90: #{tpu_custom_call.1} parent=5 // pred_check_branch
        %799 = sbr.rel (%p797) target = $region92
      $region91: #{tpu_custom_call.1} parent=5 // pred_region
        %s800 = ssub.s32 %s29, 2
        // Predicated region
        $region93: #{tpu_custom_call.1} parent=91 // pred_check
          %p801 = pneg %p294
        $region94: #{tpu_custom_call.1} parent=91 // pred_check_branch
          %803 = sbr.rel (%p801) target = $region96
        $region95: #{tpu_custom_call.1} parent=91 // pred_region
          %s804 = sand.u32 %s279, 1
          %s805 = scalar_lea.sflag [#allocation4], %s804
          %s806 = sand.u32 %s279, 1
          %s807 = smul.addr %s806, 48
          %s808 = scalar_lea.vmem [#allocation14], %s807
          %809 = dma.done %s805, 768
        $region96: #{tpu_custom_call.1} parent=91 // pred_fallthru
          _
      $region92: #{tpu_custom_call.1} parent=5 // pred_fallthru
        _
    $region6: #{tpu_custom_call.1} parent=1 // loop_footer
      %s33 = sadd.s32 1, %s29
    $region7: #{tpu_custom_call.1} parent=1 // loop_footer_branch
      %28 = sbr.rel target = $region3
    $region8: #{tpu_custom_call.1} parent=1 // loop_exit
      _
    %810 = vsyncpa [#allocation3], 1
    %s811 = scalar_lea.sflag [#allocation3], 1
    %812 = vsyncpa %s811, 1
    %813 = vsyncpa [#allocation6], 1
    %s814 = scalar_lea.sflag [#allocation6], 1
    %815 = vsyncpa %s814, 1
    %816 = vsyncpa [#allocation9], 1
    %s817 = scalar_lea.sflag [#allocation9], 1
    %818 = vsyncpa %s817, 1
    %819 = vsyncpa [#allocation12], 1
    %s820 = scalar_lea.sflag [#allocation12], 1
    %821 = vsyncpa %s820, 1
    %822 = vsyncpa [#allocation4], 1
    %s823 = scalar_lea.sflag [#allocation4], 1
    %824 = vsyncpa %s823, 1

</llo_original>
